<compile_context>
chip_gen: v6e
topology: v6e:2x2x1
jax: 0.10.0
libtpu: 0.0.40
codegen_flags: <defaults>
</compile_context>

<pallas_src>
import functools

import jax
import jax.numpy as jnp
from jax import lax
from jax.experimental import pallas as pl
from jax.experimental.pallas import tpu as pltpu

_LANE = 128
_SUBLANE = 8
_V_TILE_MAX = 2048          # vocab rows resident in VMEM per grid step
_B_TILE_MAX = 256           # fills the 2x256 MXU on v6e/v7x


def _round_up(x, m):
    return -(-x // m) * m


def _fused_kernel(ids_ref, table_ref, w1_ref, b1_ref, w2_ref, b2_ref, out_ref,
                  acc_ref, *, inv_seq_len):
    """Fused embedding-gather + mean + Linear/ReLU/Linear.

    Grid = (batch_tiles [parallel], vocab_tiles [arbitrary, reduction]).

    ids_ref:   (bT, S)      int32   token ids (batch tile)
    table_ref: (Vt, E)      bf16    embedding-table vocab tile
    w1_ref:    (E,  2E)     bf16    txt1 weight, (in, out) layout
    b1_ref:    (1,  2E)     f32
    w2_ref:    (2E, Cpad)   bf16    txt2 weight, (in, out) layout, lane-padded
    b2_ref:    (1,  Cpad)   f32
    out_ref:   (bT, Cpad)   f32     lane-dense output block (same block for all v)
    acc_ref:   (bT, E)      f32     scratch: running sum of gathered embeddings
    """
    v = pl.program_id(1)
    nv = pl.num_programs(1)

    @pl.when(v == 0)
    def _():
        acc_ref[...] = jnp.zeros_like(acc_ref)

    ids = ids_ref[...]                                  # (bT, S) int32
    bT, S = ids.shape
    vt = table_ref.shape[0]

    # Lane-dense one-hot counts for this vocab tile: counts[b, j] = #{s: ids[b,s] == v*vt + j}.
    # S is small and static, so the loop is unrolled; intermediates stay (bT, vt) int32 on the VPU.
    base = v * vt
    iota_v = base + lax.broadcasted_iota(jnp.int32, (bT, vt), 1)
    counts = jnp.zeros((bT, vt), jnp.int32)
    for s in range(S):                                  # note: chunk this loop if S gets large
        counts = counts + (ids[:, s:s + 1] == iota_v).astype(jnp.int32)

    # Single convert (exact for S <= 256), then MXU contraction against the bf16 table tile.
    counts_mm = counts.astype(jnp.float32).astype(table_ref.dtype)
    acc_ref[...] += jnp.dot(counts_mm, table_ref[...],
                            preferred_element_type=jnp.float32)   # (bT, E) f32

    @pl.when(v == nv - 1)
    def _():
        mean = acc_ref[...] * inv_seq_len                          # (bT, E) f32
        h = jnp.dot(mean.astype(w1_ref.dtype), w1_ref[...],
                    preferred_element_type=jnp.float32) + b1_ref[...]
        h = jnp.maximum(h, 0.0)                                    # ReLU in f32
        out = jnp.dot(h.astype(w2_ref.dtype), w2_ref[...],
                      preferred_element_type=jnp.float32) + b2_ref[...]
        out_ref[...] = out.astype(out_ref.dtype)                   # unmasked lane-dense store


@functools.partial(jax.jit, static_argnums=(6, 7))
def _forward_impl(token_ids, table_p, w1_t, b1, w2_p, b2_p, num_classes, v_tile):
    token_ids = token_ids.astype(jnp.int32)
    B, S = token_ids.shape
    V_pad, E = table_p.shape
    E2 = w1_t.shape[1]
    Cpad = w2_p.shape[1]
    nv = V_pad // v_tile

    # Batch tiling: pad to a sublane multiple; when there is enough work, split
    # into >= 2 parallel tiles (v7x megacore), capped at 256 MXU rows.
    B8 = _round_up(B, _SUBLANE)
    if B8 >= 2 * _SUBLANE:
        b_tile = min(_B_TILE_MAX, _round_up(pl.cdiv(B8, 2), _SUBLANE))
    else:
        b_tile = B8
    nb = pl.cdiv(B8, b_tile)
    B_pad = nb * b_tile
    if B_pad != B:
        token_ids = jnp.pad(token_ids, ((0, B_pad - B), (0, 0)))

    # Scoped-VMEM budget derived from the actual tile sizes (+ generous headroom).
    wb = jnp.dtype(table_p.dtype).itemsize
    est = (2 * b_tile * S * 4            # ids (double-buffered)
           + 2 * v_tile * E * wb         # table tile (double-buffered: v iterates)
           + 2 * E * E2 * wb             # txt1 W
           + 2 * E2 * 4                  # txt1 b
           + 2 * E2 * Cpad * wb          # txt2 W
           + 2 * Cpad * 4                # txt2 b
           + 2 * b_tile * Cpad * 4       # output block
           + b_tile * E * 4)             # accumulator scratch
    vmem_limit = int(min(112 << 20, max(32 << 20, 2 * est + (4 << 20))))

    kernel = functools.partial(_fused_kernel, inv_seq_len=1.0 / S)

    out = pl.pallas_call(
        kernel,
        out_shape=jax.ShapeDtypeStruct((B_pad, Cpad), jnp.float32),
        grid_spec=pltpu.PrefetchScalarGridSpec(
            num_scalar_prefetch=0,
            grid=(nb, nv),                                        # reduction (vocab) axis last
            in_specs=[
                pl.BlockSpec((b_tile, S), lambda i, v: (i, 0)),   # token ids (batch tile)
                pl.BlockSpec((v_tile, E), lambda i, v: (v, 0)),   # embedding table (vocab tile)
                pl.BlockSpec((E, E2), lambda i, v: (0, 0)),       # txt1 W (in,out)
                pl.BlockSpec((1, E2), lambda i, v: (0, 0)),       # txt1 b
                pl.BlockSpec((E2, Cpad), lambda i, v: (0, 0)),    # txt2 W (in,out), lane-padded
                pl.BlockSpec((1, Cpad), lambda i, v: (0, 0)),     # txt2 b, lane-padded
            ],
            out_specs=pl.BlockSpec((b_tile, Cpad), lambda i, v: (i, 0)),
            scratch_shapes=[pltpu.VMEM((b_tile, E), jnp.float32)],
        ),
        compiler_params=pltpu.CompilerParams(
            dimension_semantics=("parallel", "arbitrary"),
            vmem_limit_bytes=vmem_limit),
    )(token_ids, table_p, w1_t, b1, w2_p, b2_p)

    return out[:B, :num_classes]


def val_text_word_forward(token_ids, prepared):
    """token_ids: (B, S) int32 (== x[0] of the PyTorch module). prepared: see prepare_params."""
    return _forward_impl(token_ids, prepared["table"], prepared["w1_t"], prepared["b1"],
                         prepared["w2_p"], prepared["b2_p"],
                         prepared["num_classes"], prepared["v_tile"])


def prepare_params(params, matmul_dtype=jnp.bfloat16):
    """One-time parameter prep (outside the per-call path):
      - transpose Linear weights from PyTorch (out,in) to (in,out);
      - cast MXU operands (table, txt1 W, txt2 W) to bf16 (biases stay f32);
      - zero-pad the vocab to a multiple of the vocab tile and the classifier
        output to a lane-dense 128 multiple."""
    table = jnp.asarray(params["embedding"], jnp.float32)              # (V, E)
    w1_t = jnp.asarray(params["txt1_w"], jnp.float32).T                # (E, 2E)
    b1 = jnp.asarray(params["txt1_b"], jnp.float32)[None, :]           # (1, 2E)
    w2_t = jnp.asarray(params["txt2_w"], jnp.float32).T                # (2E, C)
    b2 = jnp.asarray(params["txt2_b"], jnp.float32)[None, :]           # (1, C)

    V, E = table.shape
    C = w2_t.shape[1]

    v_tile = min(_round_up(V, _SUBLANE), _V_TILE_MAX)
    V_pad = _round_up(V, v_tile)
    table_p = jnp.zeros((V_pad, E), matmul_dtype).at[:V].set(table.astype(matmul_dtype))

    c_pad = _round_up(C, _LANE)
    w2_p = jnp.zeros((w2_t.shape[0], c_pad), matmul_dtype).at[:, :C].set(
        w2_t.astype(matmul_dtype))
    b2_p = jnp.zeros((1, c_pad), jnp.float32).at[:, :C].set(b2)

    return {
        "table": table_p,
        "w1_t": w1_t.astype(matmul_dtype),
        "b1": b1,
        "w2_p": w2_p,
        "b2_p": b2_p,
        "num_classes": C,   # static python int
        "v_tile": v_tile,   # static python int
    }


def init_params(key, n_vocab, embed, num_classes):
    """Deterministic synthetic parameters matching the module's __init__ shapes
    (PyTorch layouts: nn.Linear weight is (out_features, in_features))."""
    k = jax.random.split(key, 5)
    emb_table = jax.random.normal(k[0], (n_vocab, embed), jnp.float32) * 0.1
    # padding_idx = n_vocab - 1 -> zero row (as nn.Embedding does at init)
    emb_table = emb_table.at[n_vocab - 1].set(0.0)
    return {
        "embedding": emb_table,
        "txt1_w": jax.random.normal(k[1], (2 * embed, embed), jnp.float32) * 0.05,
        "txt1_b": jax.random.normal(k[2], (2 * embed,), jnp.float32) * 0.01,
        "txt2_w": jax.random.normal(k[3], (num_classes, 2 * embed), jnp.float32) * 0.05,
        "txt2_b": jax.random.normal(k[4], (num_classes,), jnp.float32) * 0.01,
    }


def reference_forward(token_ids, params):
    """Pure-JAX f32 reference for correctness checking (matches the PyTorch forward)."""
    emb = jnp.take(params["embedding"], token_ids, axis=0)
    # TODO(synk): dropout layers are identity at inference; no stochastic masking emitted.
    mean = jnp.mean(emb, axis=1)
    h = jnp.maximum(mean @ params["txt1_w"].T + params["txt1_b"], 0.0)
    return h @ params["txt2_w"].T + params["txt2_b"]


if __name__ == "__main__":
    key = jax.random.PRNGKey(0)
    n_vocab, embed, num_classes = 64, 32, 4
    batch, seq = 2, 8

    pkey, xkey = jax.random.split(key)
    params = init_params(pkey, n_vocab, embed, num_classes)
    prepared = prepare_params(params)   # one-time prep: transposes, bf16 casts, padding
    token_ids = jax.random.randint(xkey, (batch, seq), 0, n_vocab, dtype=jnp.int32)

    out = val_text_word_forward(token_ids, prepared)
    out = jax.block_until_ready(out)

    ref = reference_forward(token_ids, params)
    assert out.shape == (batch, num_classes)
    # bf16 MXU operands -> ~1e-2 relative rounding vs the f32 reference.
    assert jnp.allclose(out, ref, atol=1e-2, rtol=1e-2), "mismatch vs reference"
    print("KERNEL_OK")
</pallas_src>

<mosaic_0001>
module attributes {stable_mosaic.version = 11 : i64} {
  func.func @_fused_kernel(%arg0: i32, %arg1: i32, %arg2: memref<8x8xi32, #tpu.memory_space<vmem>>, %arg3: memref<64x32xbf16, #tpu.memory_space<vmem>>, %arg4: memref<32x64xbf16, #tpu.memory_space<vmem>>, %arg5: memref<1x64xf32, #tpu.memory_space<vmem>>, %arg6: memref<64x128xbf16, #tpu.memory_space<vmem>>, %arg7: memref<1x128xf32, #tpu.memory_space<vmem>>, %arg8: memref<8x128xf32, #tpu.memory_space<vmem>>, %arg9: memref<8x32xf32, #tpu.memory_space<vmem>>) attributes {dimension_semantics = [#tpu.dimension_semantics<parallel>, #tpu.dimension_semantics<arbitrary>], iteration_bounds = array<i64: 1, 1>, scalar_prefetch = 0 : i64, scratch_operands = 1 : i64, tpu.core_type = #tpu.core_type<tc>, window_params = [{transform_indices = @transform_0, window_bounds = array<i64: 8, 8>}, {transform_indices = @transform_1, window_bounds = array<i64: 64, 32>}, {pipeline_mode = #tpu.pipeline_mode<synchronous>, transform_indices = @transform_2, window_bounds = array<i64: 32, 64>}, {pipeline_mode = #tpu.pipeline_mode<synchronous>, transform_indices = @transform_3, window_bounds = array<i64: 1, 64>}, {pipeline_mode = #tpu.pipeline_mode<synchronous>, transform_indices = @transform_4, window_bounds = array<i64: 64, 128>}, {pipeline_mode = #tpu.pipeline_mode<synchronous>, transform_indices = @transform_5, window_bounds = array<i64: 1, 128>}, {transform_indices = @transform_6, window_bounds = array<i64: 8, 128>}]} {
    %c0_i32 = arith.constant 0 : i32
    %0 = arith.cmpi eq, %arg1, %c0_i32 : i32
    %1 = arith.extui %0 : i1 to i32
    %c0_i32_0 = arith.constant 0 : i32
    %2 = arith.cmpi ne, %1, %c0_i32_0 : i32
    scf.if %2 {
      %cst_11 = arith.constant 0.000000e+00 : f32
      %59 = vector.broadcast %cst_11 : f32 to vector<8x32xf32>
      %c0_12 = arith.constant 0 : index
      %c0_13 = arith.constant 0 : index
      %60 = vector.load %arg9[%c0_12, %c0_13] : memref<8x32xf32, #tpu.memory_space<vmem>>, vector<8x32xf32>
      tpu.vector_store %arg9[%c0_12, %c0_13], %59 {strides = array<i32>} : memref<8x32xf32, #tpu.memory_space<vmem>>, vector<8x32xf32>,
    } else {
    }
    %c0 = arith.constant 0 : index
    %c0_1 = arith.constant 0 : index
    %3 = vector.load %arg2[%c0, %c0_1] : memref<8x8xi32, #tpu.memory_space<vmem>>, vector<8x8xi32>
    %c64_i32 = arith.constant 64 : i32
    %4 = arith.muli %arg1, %c64_i32 : i32
    %5 = tpu.iota {dimensions = array<i32: 1>} : vector<8x64xi32>
    %6 = vector.broadcast %4 : i32 to vector<8x64xi32>
    %7 = arith.addi %6, %5 : vector<8x64xi32>
    %c0_i32_2 = arith.constant 0 : i32
    %8 = vector.broadcast %c0_i32_2 : i32 to vector<8x64xi32>
    %9 = vector.extract_strided_slice %3 {offsets = [0, 0], sizes = [8, 1], strides = [1, 1]} : vector<8x8xi32> to vector<8x1xi32>
    %10 = vector.broadcast %9 : vector<8x1xi32> to vector<8x64xi32>
    %11 = arith.cmpi eq, %10, %7 : vector<8x64xi32>
    %12 = arith.extui %11 : vector<8x64xi1> to vector<8x64xi32>
    %13 = arith.addi %8, %12 : vector<8x64xi32>
    %14 = vector.extract_strided_slice %3 {offsets = [0, 1], sizes = [8, 1], strides = [1, 1]} : vector<8x8xi32> to vector<8x1xi32>
    %15 = vector.broadcast %14 : vector<8x1xi32> to vector<8x64xi32>
    %16 = arith.cmpi eq, %15, %7 : vector<8x64xi32>
    %17 = arith.extui %16 : vector<8x64xi1> to vector<8x64xi32>
    %18 = arith.addi %13, %17 : vector<8x64xi32>
    %19 = vector.extract_strided_slice %3 {offsets = [0, 2], sizes = [8, 1], strides = [1, 1]} : vector<8x8xi32> to vector<8x1xi32>
    %20 = vector.broadcast %19 : vector<8x1xi32> to vector<8x64xi32>
    %21 = arith.cmpi eq, %20, %7 : vector<8x64xi32>
    %22 = arith.extui %21 : vector<8x64xi1> to vector<8x64xi32>
    %23 = arith.addi %18, %22 : vector<8x64xi32>
    %24 = vector.extract_strided_slice %3 {offsets = [0, 3], sizes = [8, 1], strides = [1, 1]} : vector<8x8xi32> to vector<8x1xi32>
    %25 = vector.broadcast %24 : vector<8x1xi32> to vector<8x64xi32>
    %26 = arith.cmpi eq, %25, %7 : vector<8x64xi32>
    %27 = arith.extui %26 : vector<8x64xi1> to vector<8x64xi32>
    %28 = arith.addi %23, %27 : vector<8x64xi32>
    %29 = vector.extract_strided_slice %3 {offsets = [0, 4], sizes = [8, 1], strides = [1, 1]} : vector<8x8xi32> to vector<8x1xi32>
    %30 = vector.broadcast %29 : vector<8x1xi32> to vector<8x64xi32>
    %31 = arith.cmpi eq, %30, %7 : vector<8x64xi32>
    %32 = arith.extui %31 : vector<8x64xi1> to vector<8x64xi32>
    %33 = arith.addi %28, %32 : vector<8x64xi32>
    %34 = vector.extract_strided_slice %3 {offsets = [0, 5], sizes = [8, 1], strides = [1, 1]} : vector<8x8xi32> to vector<8x1xi32>
    %35 = vector.broadcast %34 : vector<8x1xi32> to vector<8x64xi32>
    %36 = arith.cmpi eq, %35, %7 : vector<8x64xi32>
    %37 = arith.extui %36 : vector<8x64xi1> to vector<8x64xi32>
    %38 = arith.addi %33, %37 : vector<8x64xi32>
    %39 = vector.extract_strided_slice %3 {offsets = [0, 6], sizes = [8, 1], strides = [1, 1]} : vector<8x8xi32> to vector<8x1xi32>
    %40 = vector.broadcast %39 : vector<8x1xi32> to vector<8x64xi32>
    %41 = arith.cmpi eq, %40, %7 : vector<8x64xi32>
    %42 = arith.extui %41 : vector<8x64xi1> to vector<8x64xi32>
    %43 = arith.addi %38, %42 : vector<8x64xi32>
    %44 = vector.extract_strided_slice %3 {offsets = [0, 7], sizes = [8, 1], strides = [1, 1]} : vector<8x8xi32> to vector<8x1xi32>
    %45 = vector.broadcast %44 : vector<8x1xi32> to vector<8x64xi32>
    %46 = arith.cmpi eq, %45, %7 : vector<8x64xi32>
    %47 = arith.extui %46 : vector<8x64xi1> to vector<8x64xi32>
    %48 = arith.addi %43, %47 : vector<8x64xi32>
    %49 = arith.sitofp %48 : vector<8x64xi32> to vector<8x64xf32>
    %50 = arith.truncf %49 : vector<8x64xf32> to vector<8x64xbf16>
    %c0_3 = arith.constant 0 : index
    %c0_4 = arith.constant 0 : index
    %51 = vector.load %arg9[%c0_3, %c0_4] : memref<8x32xf32, #tpu.memory_space<vmem>>, vector<8x32xf32>
    %c0_5 = arith.constant 0 : index
    %c0_6 = arith.constant 0 : index
    %52 = vector.load %arg3[%c0_5, %c0_6] : memref<64x32xbf16, #tpu.memory_space<vmem>>, vector<64x32xbf16>
    %cst = arith.constant dense<0.000000e+00> : vector<8x32xf32>
    %53 = tpu.matmul %50, %52, %cst {dimension_numbers = #tpu.dot_dimension_numbers<[1], [0], [0], [1], [0, 0, 1, 1], [], []>} : vector<8x64xbf16>, vector<64x32xbf16>, vector<8x32xf32> -> vector<8x32xf32>
    %54 = arith.addf %51, %53 : vector<8x32xf32>
    %c0_7 = arith.constant 0 : index
    %c0_8 = arith.constant 0 : index
    %55 = vector.load %arg9[%c0_7, %c0_8] : memref<8x32xf32, #tpu.memory_space<vmem>>, vector<8x32xf32>
    tpu.vector_store %arg9[%c0_7, %c0_8], %54 {strides = array<i32>} : memref<8x32xf32, #tpu.memory_space<vmem>>, vector<8x32xf32>,
    %c0_i32_9 = arith.constant 0 : i32
    %56 = arith.cmpi eq, %arg1, %c0_i32_9 : i32
    %57 = arith.extui %56 : i1 to i32
    %c0_i32_10 = arith.constant 0 : i32
    %58 = arith.cmpi ne, %57, %c0_i32_10 : i32
    scf.if %58 {
      %c0_11 = arith.constant 0 : index
      %c0_12 = arith.constant 0 : index
      %59 = vector.load %arg9[%c0_11, %c0_12] : memref<8x32xf32, #tpu.memory_space<vmem>>, vector<8x32xf32>
      %cst_13 = arith.constant 1.250000e-01 : f32
      %60 = vector.broadcast %cst_13 : f32 to vector<8x32xf32>
      %61 = arith.mulf %59, %60 : vector<8x32xf32>
      %62 = arith.truncf %61 : vector<8x32xf32> to vector<8x32xbf16>
      %c0_14 = arith.constant 0 : index
      %c0_15 = arith.constant 0 : index
      %63 = vector.load %arg4[%c0_14, %c0_15] : memref<32x64xbf16, #tpu.memory_space<vmem>>, vector<32x64xbf16>
      %cst_16 = arith.constant dense<0.000000e+00> : vector<8x64xf32>
      %64 = tpu.matmul %62, %63, %cst_16 {dimension_numbers = #tpu.dot_dimension_numbers<[1], [0], [0], [1], [0, 0, 1, 1], [], []>} : vector<8x32xbf16>, vector<32x64xbf16>, vector<8x64xf32> -> vector<8x64xf32>
      %c0_17 = arith.constant 0 : index
      %c0_18 = arith.constant 0 : index
      %65 = vector.load %arg5[%c0_17, %c0_18] : memref<1x64xf32, #tpu.memory_space<vmem>>, vector<1x64xf32>
      %66 = vector.broadcast %65 : vector<1x64xf32> to vector<8x64xf32>
      %67 = arith.addf %64, %66 : vector<8x64xf32>
      %cst_19 = arith.constant 0.000000e+00 : f32
      %68 = vector.broadcast %cst_19 : f32 to vector<8x64xf32>
      %69 = arith.maximumf %67, %68 : vector<8x64xf32>
      %70 = arith.truncf %69 : vector<8x64xf32> to vector<8x64xbf16>
      %c0_20 = arith.constant 0 : index
      %c0_21 = arith.constant 0 : index
      %71 = vector.load %arg6[%c0_20, %c0_21] : memref<64x128xbf16, #tpu.memory_space<vmem>>, vector<64x128xbf16>
      %cst_22 = arith.constant dense<0.000000e+00> : vector<8x128xf32>
      %72 = tpu.matmul %70, %71, %cst_22 {dimension_numbers = #tpu.dot_dimension_numbers<[1], [0], [0], [1], [0, 0, 1, 1], [], []>} : vector<8x64xbf16>, vector<64x128xbf16>, vector<8x128xf32> -> vector<8x128xf32>
      %c0_23 = arith.constant 0 : index
      %c0_24 = arith.constant 0 : index
      %73 = vector.load %arg7[%c0_23, %c0_24] : memref<1x128xf32, #tpu.memory_space<vmem>>, vector<1x128xf32>
      %74 = vector.broadcast %73 : vector<1x128xf32> to vector<8x128xf32>
      %75 = arith.addf %72, %74 : vector<8x128xf32>
      %c0_25 = arith.constant 0 : index
      %c0_26 = arith.constant 0 : index
      %76 = vector.load %arg8[%c0_25, %c0_26] : memref<8x128xf32, #tpu.memory_space<vmem>>, vector<8x128xf32>
      tpu.vector_store %arg8[%c0_25, %c0_26], %75 {strides = array<i32>} : memref<8x128xf32, #tpu.memory_space<vmem>>, vector<8x128xf32>,
    } else {
    }
    return
  }
  func.func @transform_0(%arg0: i32, %arg1: i32) -> (i32, i32) {
    %c0_i32 = arith.constant 0 : i32
    %c0_i32_0 = arith.constant 0 : i32
    return %arg0, %c0_i32 : i32, i32
  }
  func.func @transform_1(%arg0: i32, %arg1: i32) -> (i32, i32) {
    %c0_i32 = arith.constant 0 : i32
    %c0_i32_0 = arith.constant 0 : i32
    return %arg1, %c0_i32 : i32, i32
  }
  func.func @transform_2(%arg0: i32, %arg1: i32) -> (i32, i32) {
    %c0_i32 = arith.constant 0 : i32
    %c0_i32_0 = arith.constant 0 : i32
    %c0_i32_1 = arith.constant 0 : i32
    return %c0_i32, %c0_i32_0 : i32, i32
  }
  func.func @transform_3(%arg0: i32, %arg1: i32) -> (i32, i32) {
    %c0_i32 = arith.constant 0 : i32
    %c0_i32_0 = arith.constant 0 : i32
    %c0_i32_1 = arith.constant 0 : i32
    return %c0_i32, %c0_i32_0 : i32, i32
  }
  func.func @transform_4(%arg0: i32, %arg1: i32) -> (i32, i32) {
    %c0_i32 = arith.constant 0 : i32
    %c0_i32_0 = arith.constant 0 : i32
    %c0_i32_1 = arith.constant 0 : i32
    return %c0_i32, %c0_i32_0 : i32, i32
  }
  func.func @transform_5(%arg0: i32, %arg1: i32) -> (i32, i32) {
    %c0_i32 = arith.constant 0 : i32
    %c0_i32_0 = arith.constant 0 : i32
    %c0_i32_1 = arith.constant 0 : i32
    return %c0_i32, %c0_i32_0 : i32, i32
  }
  func.func @transform_6(%arg0: i32, %arg1: i32) -> (i32, i32) {
    %c0_i32 = arith.constant 0 : i32
    %c0_i32_0 = arith.constant 0 : i32
    return %arg0, %c0_i32 : i32, i32
  }
}

</mosaic_0001>

<llo_original>
// kernel: _forward_impl.1
$region0: #{_forward_impl.1}
  #allocation0 [shape = 'u32[]', space=smem, size = 0x4, offset = 0x4, fixed_abs, tag = 'smem constant byte address 0x4 - core index']
  #allocation1 [shape = 'u32[144,128]{1,0:T(1,128)}', space=vmem, size = 0x12000, scoped, tag = 'internal scratch']
  #allocation2 [shape = 'f32[8,32]{1,0:T(8,128)}', space=vmem, size = 0x1000, scoped, tag = 'scratch operand']
  %s0 = inlined_call_operand.vmem [shape: s32[8,8], index: 0, kind: input, shape index: {}]
  %s1 = inlined_call_operand.vmem [shape: bf16[64,32], index: 1, kind: input, shape index: {}]
  %s2 = inlined_call_operand.vmem [shape: bf16[32,64], index: 2, kind: input, shape index: {}]
  %s3 = inlined_call_operand.vmem [shape: f32[1,64], index: 3, kind: input, shape index: {}]
  %s4 = inlined_call_operand.vmem [shape: bf16[64,128], index: 4, kind: input, shape index: {}]
  %s5 = inlined_call_operand.vmem [shape: f32[1,128], index: 5, kind: input, shape index: {}]
  %s6 = inlined_call_operand.vmem [shape: f32[8,128], index: 6, kind: output, shape index: {}]
  %s7 = sld [smem:[#allocation0]]
  $region42: #{_forward_impl.1} parent=0
    _
  %s9 = ssub.s32 1, %s7
  %s10 = scalar_select 0, %s9, %s7
  // Predicated region
  $region2: #{_forward_impl.1} parent=0 // pred_check
    _
  $region3: #{_forward_impl.1} parent=0 // pred_check_branch
    %12 = sbr.rel (0) target = $region5
  $region4: #{_forward_impl.1} parent=0 // pred_region
    _
  $region5: #{_forward_impl.1} parent=0 // pred_fallthru
    _
  // Predicated region
  $region6: #{_forward_impl.1} parent=0 // pred_check
    _
  $region7: #{_forward_impl.1} parent=0 // pred_check_branch
    %14 = sbr.rel (0) target = $region9
  $region8: #{_forward_impl.1} parent=0 // pred_region
    _
  $region9: #{_forward_impl.1} parent=0 // pred_fallthru
    _
  // Predicated region
  $region10: #{_forward_impl.1} parent=0 // pred_check
    _
  $region11: #{_forward_impl.1} parent=0 // pred_check_branch
    %16 = sbr.rel (0) target = $region13
  $region12: #{_forward_impl.1} parent=0 // pred_region
    _
  $region13: #{_forward_impl.1} parent=0 // pred_fallthru
    _
  // Predicated region
  $region14: #{_forward_impl.1} parent=0 // pred_check
    _
  $region15: #{_forward_impl.1} parent=0 // pred_check_branch
    %18 = sbr.rel (0) target = $region17
  $region16: #{_forward_impl.1} parent=0 // pred_region
    _
  $region17: #{_forward_impl.1} parent=0 // pred_fallthru
    _
  // Predicated region
  $region18: #{_forward_impl.1} parent=0 // pred_check
    _
  $region19: #{_forward_impl.1} parent=0 // pred_check_branch
    %20 = sbr.rel (0) target = $region21
  $region20: #{_forward_impl.1} parent=0 // pred_region
    _
  $region21: #{_forward_impl.1} parent=0 // pred_fallthru
    _
  // Predicated region
  $region22: #{_forward_impl.1} parent=0 // pred_check
    _
  $region23: #{_forward_impl.1} parent=0 // pred_check_branch
    %22 = sbr.rel (0) target = $region25
  $region24: #{_forward_impl.1} parent=0 // pred_region
    _
  $region25: #{_forward_impl.1} parent=0 // pred_fallthru
    _
  %p24 = scmp.eq.s32.totalorder 0, 0
  // Predicated region
  $region26: #{_forward_impl.1} parent=0 // pred_check
    %p25 = pneg %p24
  $region27: #{_forward_impl.1} parent=0 // pred_check_branch
    %27 = sbr.rel (%p25) target = $region29
  $region28: #{_forward_impl.1} parent=0 // pred_region
    %vm28 = vcmask 261120
    %29 = vst.msk [vmem:[#allocation2] sm:$0xff] %vm28, 0.0
  $region29: #{_forward_impl.1} parent=0 // pred_fallthru
    _
  %v30 = vld [vmem:[%s0] sm:$0xff]
  %s31 = smul.u32 0, 64
  %v32 = vlaneseq
  %v33 = vand.u32 %v32, 127
  %v34 = vstv %s31
  %v35 = vadd.s32 %v34, %v33
  %36 = vset.pattern.permute.xlu0 0
  %37 = vperm.xlu0 %36, %v30
  %v38 = vpop.permute.xlu0 %37
  %vm39 = vcmp.eq.s32.totalorder %v38, %v35
  %v40 = vsel %vm39, 1, 0
  %41 = vset.pattern.permute.xlu0 1
  %42 = vperm.xlu0 %41, %v30
  %v43 = vpop.permute.xlu0 %42
  %vm44 = vcmp.eq.s32.totalorder %v43, %v35
  %v45 = vsel %vm44, 1, 0
  %v46 = vadd.s32 %v40, %v45
  %47 = vset.pattern.permute.xlu0 2
  %48 = vperm.xlu0 %47, %v30
  %v49 = vpop.permute.xlu0 %48
  %vm50 = vcmp.eq.s32.totalorder %v49, %v35
  %v51 = vsel %vm50, 1, 0
  %v52 = vadd.s32 %v46, %v51
  %53 = vset.pattern.permute.xlu0 3
  %54 = vperm.xlu0 %53, %v30
  %v55 = vpop.permute.xlu0 %54
  %vm56 = vcmp.eq.s32.totalorder %v55, %v35
  %v57 = vsel %vm56, 1, 0
  %v58 = vadd.s32 %v52, %v57
  %59 = vset.pattern.permute.xlu0 4
  %60 = vperm.xlu0 %59, %v30
  %v61 = vpop.permute.xlu0 %60
  %vm62 = vcmp.eq.s32.totalorder %v61, %v35
  %v63 = vsel %vm62, 1, 0
  %v64 = vadd.s32 %v58, %v63
  %65 = vset.pattern.permute.xlu0 5
  %66 = vperm.xlu0 %65, %v30
  %v67 = vpop.permute.xlu0 %66
  %vm68 = vcmp.eq.s32.totalorder %v67, %v35
  %v69 = vsel %vm68, 1, 0
  %v70 = vadd.s32 %v64, %v69
  %71 = vset.pattern.permute.xlu0 6
  %72 = vperm.xlu0 %71, %v30
  %v73 = vpop.permute.xlu0 %72
  %vm74 = vcmp.eq.s32.totalorder %v73, %v35
  %v75 = vsel %vm74, 1, 0
  %v76 = vadd.s32 %v70, %v75
  %77 = vset.pattern.permute.xlu0 7
  %78 = vperm.xlu0 %77, %v30
  %v79 = vpop.permute.xlu0 %78
  %vm80 = vcmp.eq.s32.totalorder %v79, %v35
  %v81 = vsel %vm80, 1, 0
  %v82 = vadd.s32 %v76, %v81
  %v83 = vcvt.s32.f32 %v82
  %v84 = vpack.c.bf16 %v83, %v83
  %v85 = vld [vmem:[#allocation2] sm:$0xff]
  %v86 = vld [vmem:[%s1] sm:$0xf]
  %v87 = vld [vmem:[%s1 + $0x4] sm:$0xf]
  %v88 = vld [vmem:[%s1 + $0x8] sm:$0xf]
  %v89 = vld [vmem:[%s1 + $0xc] sm:$0xf]
  %v90 = vld [vmem:[%s1 + $0x10] sm:$0xf]
  %v91 = vld [vmem:[%s1 + $0x14] sm:$0xf]
  %v92 = vld [vmem:[%s1 + $0x18] sm:$0xf]
  %v93 = vld [vmem:[%s1 + $0x1c] sm:$0xf]
  %v102 = vunpack.c.l.b16 %v86
  %v103 = vunpack.c.l.b16 %v87
  %v104 = vunpack.c.l.b16 %v88
  %v105 = vunpack.c.l.b16 %v89
  %v106 = vunpack.c.l.b16 %v90
  %v107 = vunpack.c.l.b16 %v91
  %v108 = vunpack.c.l.b16 %v92
  %v109 = vunpack.c.l.b16 %v93
  %v110 = vpack.c.b16 %v103, %v102
  %v111 = vpack.c.b16 %v105, %v104
  %v112 = vpack.c.b16 %v107, %v106
  %v113 = vpack.c.b16 %v109, %v108
  %vm118 = vcmask 523264
  %v120 = vsel %vm118, %v84, 0
  %122 = vmatprep.subr.bf16.mxu0 0
  %123 = vmatpush1.bf16.msra.mxu0 0
  %124 = vmatprep.subr.bf16.mxu0 0
  %125 = vmatpush1.bf16.msra.mxu0 0
  %126 = vmatprep.subr.bf16.mxu0 0
  %127 = vmatpush1.bf16.msra.mxu0 0
  %128 = vmatprep.subr.bf16.mxu0 0
  %129 = vmatpush1.bf16.msra.mxu0 0
  %130 = vmatprep.subr.bf16.mxu0 0
  %131 = vmatpush1.bf16.msra.mxu0 %v113
  %132 = vmatprep.subr.bf16.mxu0 0
  %133 = vmatpush1.bf16.msra.mxu0 %v112
  %134 = vmatprep.subr.bf16.mxu0 0
  %135 = vmatpush1.bf16.msra.mxu0 %v111
  %136 = vmatprep.subr.bf16.mxu0 0
  %137 = vmatpush1.bf16.msra.mxu0 %v110
  %138 = vmatprep.subr.bf16.mxu0 0
  %139 = vmatpush2.bf16.msra.mxu0 0
  %140 = vmatprep.subr.bf16.mxu0 0
  %141 = vmatpush2.bf16.msra.mxu0 0
  %142 = vmatprep.subr.bf16.mxu0 0
  %143 = vmatpush2.bf16.msra.mxu0 0
  %144 = vmatprep.subr.bf16.mxu0 0
  %145 = vmatpush2.bf16.msra.mxu0 0
  %146 = vmatprep.subr.bf16.mxu0 0
  %147 = vmatpush2.bf16.msra.mxu0 0
  %148 = vmatprep.subr.bf16.mxu0 0
  %149 = vmatpush2.bf16.msra.mxu0 0
  %150 = vmatprep.subr.bf16.mxu0 0
  %151 = vmatpush2.bf16.msra.mxu0 0
  %152 = vmatprep.subr.bf16.mxu0 0
  %153 = vmatpush2.bf16.msra.mxu0 0
  %154 = vmatprep.mubr.bf16.mxu0 0
  %155 = vmatmul.mubr.bf16.gmra.mxu0 %v120
  %v156 = vpop.f32.mrf.mxu0
  %v157 = vadd.f32 0.0, %v156
  %v158 = vpop.f32.mrf.mxu0
  %v159 = vpop.f32.mrf.mxu0
  %v160 = vpop.f32.mrf.mxu0
  %161 = vdwg.mxu0
  %v162 = vadd.f32 %v85, %v157
  %vm163 = vcmask 261120
  %164 = vst.msk [vmem:[#allocation2] sm:$0xff] %vm163, %v162
  // Predicated region
  $region30: #{_forward_impl.1} parent=0 // pred_check
    %p165 = pneg %p24
  $region31: #{_forward_impl.1} parent=0 // pred_check_branch
    %167 = sbr.rel (%p165) target = $region33
  $region32: #{_forward_impl.1} parent=0 // pred_region
    %v168 = vld [vmem:[#allocation2] sm:$0xff]
    %v169 = vmul.f32 %v168, 0.125
    %v170 = vpack.c.bf16 %v169, %v169
    %v171 = vld [vmem:[%s2] sm:$0xf]
    %v172 = vld [vmem:[%s2 + $0x4] sm:$0xf]
    %v173 = vld [vmem:[%s2 + $0x8] sm:$0xf]
    %v174 = vld [vmem:[%s2 + $0xc] sm:$0xf]
    %v175 = vld [vmem:[%s3] sm:$0x1]
    %v177 = vlaneseq
    %v178 = vshrl.u32 %v177, 7
    %v179 = vsub.s32 0, %v178
    %v180 = vrot.slane %v175, %v179
    %v186 = vunpack.c.l.b16 %v171
    %v187 = vunpack.c.l.b16 %v172
    %v188 = vunpack.c.l.b16 %v173
    %v189 = vunpack.c.l.b16 %v174
    %v190 = vpack.c.b16 %v187, %v186
    %v191 = vpack.c.b16 %v189, %v188
    %v195 = vsel %vm163, %v170, 0
    %197 = vmatprep.subr.bf16.mxu0 0
    %198 = vmatpush1.bf16.msra.mxu0 0
    %199 = vmatprep.subr.bf16.mxu0 0
    %200 = vmatpush1.bf16.msra.mxu0 0
    %201 = vmatprep.subr.bf16.mxu0 0
    %202 = vmatpush1.bf16.msra.mxu0 0
    %203 = vmatprep.subr.bf16.mxu0 0
    %204 = vmatpush1.bf16.msra.mxu0 0
    %205 = vmatprep.subr.bf16.mxu0 0
    %206 = vmatpush1.bf16.msra.mxu0 0
    %207 = vmatprep.subr.bf16.mxu0 0
    %208 = vmatpush1.bf16.msra.mxu0 0
    %209 = vmatprep.subr.bf16.mxu0 0
    %210 = vmatpush1.bf16.msra.mxu0 %v191
    %211 = vmatprep.subr.bf16.mxu0 0
    %212 = vmatpush1.bf16.msra.mxu0 %v190
    %213 = vmatprep.subr.bf16.mxu0 0
    %214 = vmatpush2.bf16.msra.mxu0 0
    %215 = vmatprep.subr.bf16.mxu0 0
    %216 = vmatpush2.bf16.msra.mxu0 0
    %217 = vmatprep.subr.bf16.mxu0 0
    %218 = vmatpush2.bf16.msra.mxu0 0
    %219 = vmatprep.subr.bf16.mxu0 0
    %220 = vmatpush2.bf16.msra.mxu0 0
    %221 = vmatprep.subr.bf16.mxu0 0
    %222 = vmatpush2.bf16.msra.mxu0 0
    %223 = vmatprep.subr.bf16.mxu0 0
    %224 = vmatpush2.bf16.msra.mxu0 0
    %225 = vmatprep.subr.bf16.mxu0 0
    %226 = vmatpush2.bf16.msra.mxu0 0
    %227 = vmatprep.subr.bf16.mxu0 0
    %228 = vmatpush2.bf16.msra.mxu0 0
    %229 = vmatprep.mubr.bf16.mxu0 0
    %230 = vmatmul.mubr.bf16.gmra.mxu0 %v195
    %v231 = vpop.f32.mrf.mxu0
    %v232 = vadd.f32 %v180, %v231
    %v233 = vpop.f32.mrf.mxu0
    %v234 = vpop.f32.mrf.mxu0
    %v235 = vpop.f32.mrf.mxu0
    %236 = vdwg.mxu0
    %v237 = vmax.f32 %v232, 0.0
    %v238 = vpack.c.bf16 %v237, %v237
    %v239 = vld [vmem:[%s4] sm:$0xf]
    %v240 = vld [vmem:[%s4 + $0x4] sm:$0xf]
    %v241 = vld [vmem:[%s4 + $0x8] sm:$0xf]
    %v242 = vld [vmem:[%s4 + $0xc] sm:$0xf]
    %v243 = vld [vmem:[%s4 + $0x10] sm:$0xf]
    %v244 = vld [vmem:[%s4 + $0x14] sm:$0xf]
    %v245 = vld [vmem:[%s4 + $0x18] sm:$0xf]
    %v246 = vld [vmem:[%s4 + $0x1c] sm:$0xf]
    %v247 = vld [vmem:[%s5] sm:$0x1]
    %v249 = vlaneseq
    %v250 = vshrl.u32 %v249, 7
    %v251 = vsub.s32 0, %v250
    %v252 = vrot.slane %v247, %v251
    %v262 = vunpack.c.l.b16 %v239
    %v263 = vunpack.c.l.b16 %v240
    %v264 = vunpack.c.l.b16 %v241
    %v265 = vunpack.c.l.b16 %v242
    %v266 = vunpack.c.l.b16 %v243
    %v267 = vunpack.c.l.b16 %v244
    %v268 = vunpack.c.l.b16 %v245
    %v269 = vunpack.c.l.b16 %v246
    %v270 = vpack.c.b16 %v263, %v262
    %v271 = vpack.c.b16 %v265, %v264
    %v272 = vpack.c.b16 %v267, %v266
    %v273 = vpack.c.b16 %v269, %v268
    %v279 = vsel %vm118, %v238, 0
    %281 = vmatprep.subr.bf16.mxu0 0
    %282 = vmatpush1.bf16.msra.mxu0 0
    %283 = vmatprep.subr.bf16.mxu0 0
    %284 = vmatpush1.bf16.msra.mxu0 0
    %285 = vmatprep.subr.bf16.mxu0 0
    %286 = vmatpush1.bf16.msra.mxu0 0
    %287 = vmatprep.subr.bf16.mxu0 0
    %288 = vmatpush1.bf16.msra.mxu0 0
    %289 = vmatprep.subr.bf16.mxu0 0
    %290 = vmatpush1.bf16.msra.mxu0 %v273
    %291 = vmatprep.subr.bf16.mxu0 0
    %292 = vmatpush1.bf16.msra.mxu0 %v272
    %293 = vmatprep.subr.bf16.mxu0 0
    %294 = vmatpush1.bf16.msra.mxu0 %v271
    %295 = vmatprep.subr.bf16.mxu0 0
    %296 = vmatpush1.bf16.msra.mxu0 %v270
    %297 = vmatprep.subr.bf16.mxu0 0
    %298 = vmatpush2.bf16.msra.mxu0 0
    %299 = vmatprep.subr.bf16.mxu0 0
    %300 = vmatpush2.bf16.msra.mxu0 0
    %301 = vmatprep.subr.bf16.mxu0 0
    %302 = vmatpush2.bf16.msra.mxu0 0
    %303 = vmatprep.subr.bf16.mxu0 0
    %304 = vmatpush2.bf16.msra.mxu0 0
    %305 = vmatprep.subr.bf16.mxu0 0
    %306 = vmatpush2.bf16.msra.mxu0 0
    %307 = vmatprep.subr.bf16.mxu0 0
    %308 = vmatpush2.bf16.msra.mxu0 0
    %309 = vmatprep.subr.bf16.mxu0 0
    %310 = vmatpush2.bf16.msra.mxu0 0
    %311 = vmatprep.subr.bf16.mxu0 0
    %312 = vmatpush2.bf16.msra.mxu0 0
    %313 = vmatprep.mubr.bf16.mxu0 0
    %314 = vmatmul.mubr.bf16.gmra.mxu0 %v279
    %v315 = vpop.f32.mrf.mxu0
    %v316 = vadd.f32 %v252, %v315
    %v317 = vpop.f32.mrf.mxu0
    %v318 = vpop.f32.mrf.mxu0
    %v319 = vpop.f32.mrf.mxu0
    %320 = vdwg.mxu0
    %321 = vst [vmem:[%s6] sm:$0xff] %v316
  $region33: #{_forward_impl.1} parent=0 // pred_fallthru
    _
  // Predicated region
  $region34: #{_forward_impl.1} parent=0 // pred_check
    _
  $region35: #{_forward_impl.1} parent=0 // pred_check_branch
    %323 = sbr.rel (0) target = $region37
  $region36: #{_forward_impl.1} parent=0 // pred_region
    _
  $region37: #{_forward_impl.1} parent=0 // pred_fallthru
    _
  // Predicated region
  $region38: #{_forward_impl.1} parent=0 // pred_check
    _
  $region39: #{_forward_impl.1} parent=0 // pred_check_branch
    %325 = sbr.rel (0) target = $region41
  $region40: #{_forward_impl.1} parent=0 // pred_region
    _
  $region41: #{_forward_impl.1} parent=0 // pred_fallthru
    _

</llo_original>
